<compile_context>
chip_gen: v5e
topology: v5e:2x2
jax: 0.10.0
libtpu: 0.0.40
codegen_flags: <defaults>
</compile_context>

<pallas_src>
import functools

import jax
import jax.numpy as jnp
from jax.experimental import pallas as pl
from jax.experimental.pallas import tpu as pltpu

BETA = 0.1    # self.beta_self
ALPHA = 0.5   # self.a_self
LANE = 128
SUBLANE = 8


def _round_up(v, m):
    return (v + m - 1) // m * m


def _compiler_params(block_bytes_one_buffer):
    # Explicit scoped-VMEM limit: double-buffered blocks + margin.
    limit = int(max(2 * block_bytes_one_buffer + (4 << 20), 16 << 20))
    return pltpu.CompilerParams(
        dimension_semantics=("parallel",),
        vmem_limit_bytes=limit)


# --------------------------- kernels ---------------------------

def _xw_kernel(x_ref, h_ref, w_ref, xw_ref, *, beta):
    """xw_tile = (beta*x + (1-beta)*h) @ W   (bf16 MXU inputs, f32 accumulate)."""
    xm = beta * x_ref[...] + (1.0 - beta) * h_ref[...]              # f32 VPU
    xw = jnp.dot(xm.astype(jnp.bfloat16), w_ref[...],
                 preferred_element_type=jnp.float32)                # MXU
    xw_ref[...] = xw.astype(jnp.bfloat16)


def _agg_kernel(a_ref, xw_ref, b_ref, x_ref, out_ref, *, alpha):
    """out_tile = alpha*x_tile + (1-alpha) * (A_hat_tile @ xw + b)."""
    agg = jnp.dot(a_ref[...], xw_ref[...],
                  preferred_element_type=jnp.float32)               # MXU (bf16 in)
    agg = agg + b_ref[...]                                          # f32 bias
    out_ref[...] = alpha * x_ref[...] + (1.0 - alpha) * agg         # f32 residual


# ----------------------- per-layer wrapper -----------------------

def _gcn_layer(a_bf16, x_f32, h_f32, w_bf16, b_f32, *, beta, alpha, tm):
    n_pad, d_pad = x_f32.shape
    grid = (n_pad // tm,)

    # ---- step 1: xw = (beta*x + (1-beta)*h) @ W  (row-tiled, W resident) ----
    xw_block_bytes = (tm * d_pad * 4            # x tile (f32)
                      + tm * d_pad * 4          # h tile (f32)
                      + d_pad * d_pad * 2       # W resident (bf16)
                      + tm * d_pad * 2)         # xw out tile (bf16)
    xw = pl.pallas_call(
        functools.partial(_xw_kernel, beta=beta),
        out_shape=jax.ShapeDtypeStruct((n_pad, d_pad), jnp.bfloat16),
        grid=grid,
        in_specs=[
            pl.BlockSpec((tm, d_pad), lambda i: (i, 0)),       # x rows
            pl.BlockSpec((tm, d_pad), lambda i: (i, 0)),       # h rows
            pl.BlockSpec((d_pad, d_pad), lambda i: (0, 0)),    # W resident
        ],
        out_specs=pl.BlockSpec((tm, d_pad), lambda i: (i, 0)),
        compiler_params=_compiler_params(xw_block_bytes),
    )(x_f32, h_f32, w_bf16)

    # ---- step 2: h = A_hat @ xw + b  (+ alpha residual, last layer) ----
    agg_block_bytes = (tm * n_pad * 2           # A_hat row tile (bf16, streamed)
                       + n_pad * d_pad * 2      # xw resident (bf16)
                       + SUBLANE * d_pad * 4    # bias (padded)
                       + tm * d_pad * 4         # x tile (residual)
                       + tm * d_pad * 4)        # out tile (f32)
    out = pl.pallas_call(
        functools.partial(_agg_kernel, alpha=alpha),
        out_shape=jax.ShapeDtypeStruct((n_pad, d_pad), jnp.float32),
        grid=grid,
        in_specs=[
            pl.BlockSpec((tm, n_pad), lambda i: (i, 0)),       # A_hat row tile
            pl.BlockSpec((n_pad, d_pad), lambda i: (0, 0)),    # xw resident
            pl.BlockSpec((1, d_pad), lambda i: (0, 0)),        # bias
            pl.BlockSpec((tm, d_pad), lambda i: (i, 0)),       # x rows (residual)
        ],
        out_specs=pl.BlockSpec((tm, d_pad), lambda i: (i, 0)),
        compiler_params=_compiler_params(agg_block_bytes),
    )(a_bf16, xw, b_f32, x_f32)
    return out


# --------------------------- wrapper ---------------------------

def gcn_norm_dense(edge_index, num_nodes):
    """Dense symmetric GCN normalization with improved self-loops (weight 2.0).

    edge_index: int32 [2, E], row 0 = source, row 1 = target.
    Returns A_hat[target, source] so (A_hat @ X)[i] aggregates messages into node i.
    """
    src, dst = edge_index[0], edge_index[1]
    adj = jnp.zeros((num_nodes, num_nodes), jnp.float32)
    adj = adj.at[dst, src].add(1.0)
    adj = adj + 2.0 * jnp.eye(num_nodes, dtype=jnp.float32)   # improved=True
    deg = adj.sum(axis=1)
    dinv = jnp.where(deg > 0, jax.lax.rsqrt(deg), 0.0)
    return dinv[:, None] * adj * dinv[None, :]


def gcnnet_forward(x, edge_index, params):
    """x: [N, D] float32, edge_index: [2, E] int32, params: list of 4 (W, b)."""
    n, d = x.shape
    a_hat = gcn_norm_dense(edge_index, n)

    # Padded, lane-dense layout.
    d_pad = _round_up(d, LANE)
    n8 = _round_up(n, SUBLANE)
    tm = 256 if n8 >= 256 else n8      # MXU-friendly row tile (256 on v6e/v7x)
    n_pad = _round_up(n8, tm)

    x_p = jnp.zeros((n_pad, d_pad), jnp.float32).at[:n, :d].set(x)
    a_p = jnp.zeros((n_pad, n_pad), jnp.float32).at[:n, :n].set(a_hat)
    a_bf16 = a_p.astype(jnp.bfloat16)            # bf16 MXU input, halved footprint

    w_list, b_list = [], []
    for w, b in params:
        wp = jnp.zeros((d_pad, d_pad), jnp.float32)
        wp = wp.at[:w.shape[0], :w.shape[1]].set(w)
        bp = jnp.zeros((1, d_pad), jnp.float32).at[0, :b.shape[0]].set(b)
        w_list.append(wp.astype(jnp.bfloat16))
        b_list.append(bp)

    # conv1 (beta=1.0 -> input mix is just x)
    h = _gcn_layer(a_bf16, x_p, x_p, w_list[0], b_list[0],
                   beta=1.0, alpha=0.0, tm=tm)
    # F.dropout(..., training=False) -> identity in eval mode
    # TODO(synk): training-mode dropout (stateful PRNG mask) not implemented.
    # conv2..conv4 with beta-residual input mixing; conv4 adds the final alpha blend
    h = _gcn_layer(a_bf16, x_p, h, w_list[1], b_list[1],
                   beta=BETA, alpha=0.0, tm=tm)
    h = _gcn_layer(a_bf16, x_p, h, w_list[2], b_list[2],
                   beta=BETA, alpha=0.0, tm=tm)
    out = _gcn_layer(a_bf16, x_p, h, w_list[3], b_list[3],
                     beta=BETA, alpha=ALPHA, tm=tm)
    return out[:n, :d]


def gcnnet_reference(x, edge_index, params):
    """Pure-JAX f32 reference of the same forward pass."""
    a_hat = gcn_norm_dense(edge_index, x.shape[0])

    def layer(h, w, b):
        return a_hat @ (h @ w) + b

    h = layer(x, *params[0])
    h = layer(BETA * x + (1.0 - BETA) * h, *params[1])
    h = layer(BETA * x + (1.0 - BETA) * h, *params[2])
    h = layer(BETA * x + (1.0 - BETA) * h, *params[3])
    return ALPHA * x + (1.0 - ALPHA) * h


def init_params(key, d_inp, d_hidden):
    """Deterministic glorot-style weights + small biases for 4 GCN layers.

    Note: the residual mixing in GcnNet.forward requires d_inp == d_hidden.
    """
    assert d_inp == d_hidden
    params = []
    dims = [(d_inp, d_hidden)] * 4
    for i, (fi, fo) in enumerate(dims):
        kw, kb = jax.random.split(jax.random.fold_in(key, i))
        std = (2.0 / (fi + fo)) ** 0.5
        w = std * jax.random.normal(kw, (fi, fo), jnp.float32)
        b = 0.01 * jax.random.normal(kb, (fo,), jnp.float32)
        params.append((w, b))
    return params


if __name__ == "__main__":
    key = jax.random.PRNGKey(0)
    N = 16             # number of graph nodes
    D = 64             # d_inp == d_hidden (module default; required by residual)

    kx, kp = jax.random.split(key)
    x = jax.random.normal(kx, (N, D), jnp.float32)

    # small deterministic graph: bidirectional ring over N nodes
    src = jnp.arange(N, dtype=jnp.int32)
    dst = (src + 1) % N
    edge_index = jnp.stack([jnp.concatenate([src, dst]),
                            jnp.concatenate([dst, src])], axis=0)

    params = init_params(kp, D, D)

    out = gcnnet_forward(x, edge_index, params)
    out = jax.block_until_ready(out)

    # sanity: shape/dtype, finiteness, and agreement with the f32 reference
    assert out.shape == (N, D) and out.dtype == jnp.float32
    assert bool(jnp.all(jnp.isfinite(out)))
    ref = gcnnet_reference(x, edge_index, params)
    assert bool(jnp.allclose(out, ref, rtol=1e-1, atol=1e-1)), (
        "max abs err vs f32 reference: %f" % float(jnp.max(jnp.abs(out - ref))))
    print("KERNEL_OK")
</pallas_src>

<mosaic_0001>
module attributes {stable_mosaic.version = 11 : i64} {
  func.func @_xw_kernel(%arg0: i32, %arg1: memref<16x128xf32, #tpu.memory_space<vmem>>, %arg2: memref<16x128xf32, #tpu.memory_space<vmem>>, %arg3: memref<128x128xbf16, #tpu.memory_space<vmem>>, %arg4: memref<16x128xbf16, #tpu.memory_space<vmem>>) attributes {dimension_semantics = [#tpu.dimension_semantics<parallel>], iteration_bounds = array<i64: 1>, scalar_prefetch = 0 : i64, scratch_operands = 0 : i64, tpu.core_type = #tpu.core_type<tc>, window_params = [{transform_indices = @transform_0, window_bounds = array<i64: 16, 128>}, {transform_indices = @transform_1, window_bounds = array<i64: 16, 128>}, {pipeline_mode = #tpu.pipeline_mode<synchronous>, transform_indices = @transform_2, window_bounds = array<i64: 128, 128>}, {transform_indices = @transform_3, window_bounds = array<i64: 16, 128>}]} {
    %c0 = arith.constant 0 : index
    %c0_0 = arith.constant 0 : index
    %0 = vector.load %arg1[%c0, %c0_0] : memref<16x128xf32, #tpu.memory_space<vmem>>, vector<16x128xf32>
    %cst = arith.constant 1.000000e+00 : f32
    %1 = vector.broadcast %cst : f32 to vector<16x128xf32>
    %2 = arith.mulf %1, %0 : vector<16x128xf32>
    %c0_1 = arith.constant 0 : index
    %c0_2 = arith.constant 0 : index
    %3 = vector.load %arg2[%c0_1, %c0_2] : memref<16x128xf32, #tpu.memory_space<vmem>>, vector<16x128xf32>
    %cst_3 = arith.constant 0.000000e+00 : f32
    %4 = vector.broadcast %cst_3 : f32 to vector<16x128xf32>
    %5 = arith.mulf %4, %3 : vector<16x128xf32>
    %6 = arith.addf %2, %5 : vector<16x128xf32>
    %7 = arith.truncf %6 : vector<16x128xf32> to vector<16x128xbf16>
    %c0_4 = arith.constant 0 : index
    %c0_5 = arith.constant 0 : index
    %8 = vector.load %arg3[%c0_4, %c0_5] : memref<128x128xbf16, #tpu.memory_space<vmem>>, vector<128x128xbf16>
    %cst_6 = arith.constant dense<0.000000e+00> : vector<16x128xf32>
    %9 = tpu.matmul %7, %8, %cst_6 {dimension_numbers = #tpu.dot_dimension_numbers<[1], [0], [0], [1], [0, 0, 1, 1], [], []>} : vector<16x128xbf16>, vector<128x128xbf16>, vector<16x128xf32> -> vector<16x128xf32>
    %10 = arith.truncf %9 : vector<16x128xf32> to vector<16x128xbf16>
    %c0_7 = arith.constant 0 : index
    %c0_8 = arith.constant 0 : index
    %11 = vector.load %arg4[%c0_7, %c0_8] : memref<16x128xbf16, #tpu.memory_space<vmem>>, vector<16x128xbf16>
    tpu.vector_store %arg4[%c0_7, %c0_8], %10 {strides = array<i32>} : memref<16x128xbf16, #tpu.memory_space<vmem>>, vector<16x128xbf16>,
    return
  }
  func.func @transform_0(%arg0: i32) -> (i32, i32) {
    %c0_i32 = arith.constant 0 : i32
    %c0_i32_0 = arith.constant 0 : i32
    return %arg0, %c0_i32 : i32, i32
  }
  func.func @transform_1(%arg0: i32) -> (i32, i32) {
    %c0_i32 = arith.constant 0 : i32
    %c0_i32_0 = arith.constant 0 : i32
    return %arg0, %c0_i32 : i32, i32
  }
  func.func @transform_2(%arg0: i32) -> (i32, i32) {
    %c0_i32 = arith.constant 0 : i32
    %c0_i32_0 = arith.constant 0 : i32
    %c0_i32_1 = arith.constant 0 : i32
    return %c0_i32, %c0_i32_0 : i32, i32
  }
  func.func @transform_3(%arg0: i32) -> (i32, i32) {
    %c0_i32 = arith.constant 0 : i32
    %c0_i32_0 = arith.constant 0 : i32
    return %arg0, %c0_i32 : i32, i32
  }
}

</mosaic_0001>

<llo_original>
// kernel: tpu_custom_call.1
$region0: #{tpu_custom_call.1}
  #allocation0 [shape = 'u32[]', space=smem, size = 0x4, offset = 0x4, fixed_abs, tag = 'smem constant byte address 0x4 - core index']
  #allocation1 [shape = 'u32[72,128]{1,0:T(1,128)}', space=vmem, size = 0x9000, scoped, tag = 'internal scratch']
  %s0 = inlined_call_operand.hbm [shape: f32[16,128], index: 0, kind: input, shape index: {}]
  %s1 = inlined_call_operand.hbm [shape: f32[16,128], index: 1, kind: input, shape index: {}]
  %s2 = inlined_call_operand.hbm [shape: bf16[128,128], index: 2, kind: input, shape index: {}]
  %s3 = inlined_call_operand.hbm [shape: bf16[16,128], index: 3, kind: output, shape index: {}]
  %s4 = sld [smem:[#allocation0]]
  $region34: #{tpu_custom_call.1} parent=0
    _
  %s6 = ssub.s32 1, %s4
  %s7 = scalar_select 0, %s6, %s4
  $region1: #{tpu_custom_call.1} parent=0
    #allocation2 [shape = 'u8[8192]{0}', space=vmem, size = 0x2000, scoped, tag = 'input window, operand 0, single buffered']
    #allocation3 [shape = 's32[1]{0}', space=sflag, size = 0x4, scoped, tag = 'scoped memory for tpu_custom_call.1']
    #allocation4 [shape = 's32[1]{0}', space=sflag, size = 0x4, scoped, tag = 'scoped memory for tpu_custom_call.1']
    #allocation5 [shape = 'u8[8192]{0}', space=vmem, size = 0x2000, scoped, tag = 'input window, operand 1, single buffered']
    #allocation6 [shape = 's32[1]{0}', space=sflag, size = 0x4, scoped, tag = 'scoped memory for tpu_custom_call.1']
    #allocation7 [shape = 'u8[32768]{0}', space=vmem, size = 0x8000, scoped, tag = 'input window, operand 2, single buffered']
    #allocation8 [shape = 'u8[4096]{0}', space=vmem, size = 0x1000, scoped, tag = 'output window, operand 0, single buffered']
    %8 = vsyncpa [#allocation3], 0
    %9 = vsyncpa [#allocation6], 0
    %10 = vsyncpa [#allocation4], 0
    // Predicated region
    $region2: #{tpu_custom_call.1} parent=1 // pred_check
      _
    $region3: #{tpu_custom_call.1} parent=1 // pred_check_branch
      %12 = sbr.rel (0) target = $region5
    $region4: #{tpu_custom_call.1} parent=1 // pred_region
      %14 = vsyncadd [#allocation3], 0
      %s15 = sshll.u32 %s0, 4
      %s16 = int_to_ptr.hbm [resolvable:$true] %s15
      %s17 = sshll.u32 [#allocation2], 4
      %s18 = int_to_ptr.vmem [resolvable:$true] %s17
      %23 = dma.hbm_to_vmem [thread:$0]  %s16, 256, %s18, [#allocation3], 128, 128, 8
    $region5: #{tpu_custom_call.1} parent=1 // pred_fallthru
      _
    // Predicated region
    $region6: #{tpu_custom_call.1} parent=1 // pred_check
      _
    $region7: #{tpu_custom_call.1} parent=1 // pred_check_branch
      %25 = sbr.rel (0) target = $region9
    $region8: #{tpu_custom_call.1} parent=1 // pred_region
      %27 = vsyncadd [#allocation6], 0
      %s28 = sshll.u32 %s1, 4
      %s29 = int_to_ptr.hbm [resolvable:$true] %s28
      %s30 = sshll.u32 [#allocation5], 4
      %s31 = int_to_ptr.vmem [resolvable:$true] %s30
      %36 = dma.hbm_to_vmem [thread:$0]  %s29, 256, %s31, [#allocation6], 128, 128, 8
    $region9: #{tpu_custom_call.1} parent=1 // pred_fallthru
      _
    // Predicated region
    $region10: #{tpu_custom_call.1} parent=1 // pred_check
      _
    $region11: #{tpu_custom_call.1} parent=1 // pred_check_branch
      %38 = sbr.rel (0) target = $region13
    $region12: #{tpu_custom_call.1} parent=1 // pred_region
      %40 = vsyncadd [#allocation6], 0
      %s41 = sshll.u32 %s2, 4
      %s42 = int_to_ptr.hbm [resolvable:$true] %s41
      %s43 = sshll.u32 [#allocation7], 4
      %s44 = int_to_ptr.vmem [resolvable:$true] %s43
      %49 = dma.hbm_to_vmem [thread:$0]  %s42, 1024, %s44, [#allocation6], 64, 64, 4
    $region13: #{tpu_custom_call.1} parent=1 // pred_fallthru
      _
    // Predicated region
    $region14: #{tpu_custom_call.1} parent=1 // pred_check
      _
    $region15: #{tpu_custom_call.1} parent=1 // pred_check_branch
      %51 = sbr.rel (0) target = $region17
    $region16: #{tpu_custom_call.1} parent=1 // pred_region
      %53 = dma.done [#allocation3], 256
    $region17: #{tpu_custom_call.1} parent=1 // pred_fallthru
      _
    // Predicated region
    $region18: #{tpu_custom_call.1} parent=1 // pred_check
      _
    $region19: #{tpu_custom_call.1} parent=1 // pred_check_branch
      %55 = sbr.rel (0) target = $region21
    $region20: #{tpu_custom_call.1} parent=1 // pred_region
      %57 = dma.done [#allocation6], 256
    $region21: #{tpu_custom_call.1} parent=1 // pred_fallthru
      _
    // Predicated region
    $region22: #{tpu_custom_call.1} parent=1 // pred_check
      _
    $region23: #{tpu_custom_call.1} parent=1 // pred_check_branch
      %59 = sbr.rel (0) target = $region25
    $region24: #{tpu_custom_call.1} parent=1 // pred_region
      %61 = dma.done [#allocation6], 1024
    $region25: #{tpu_custom_call.1} parent=1 // pred_fallthru
      _
    %v62 = vld [vmem:[#allocation2] sm:$0xff]
    %v63 = vld [vmem:[#allocation2 + $0x8] sm:$0xff]
    %v64 = vld [vmem:[#allocation5] sm:$0xff]
    %v65 = vld [vmem:[#allocation5 + $0x8] sm:$0xff]
    %v66 = vmul.f32 %v64, 0.0
    %v67 = vmul.f32 %v65, 0.0
    %v68 = vadd.f32 %v62, %v66
    %v69 = vadd.f32 %v63, %v67
    %v70 = vpack.c.bf16 %v69, %v68
    %v71 = vld [vmem:[#allocation7] sm:$0xf]
    %v72 = vld [vmem:[#allocation7 + $0x4] sm:$0xf]
    %v73 = vld [vmem:[#allocation7 + $0x8] sm:$0xf]
    %v74 = vld [vmem:[#allocation7 + $0xc] sm:$0xf]
    %v75 = vld [vmem:[#allocation7 + $0x10] sm:$0xf]
    %v76 = vld [vmem:[#allocation7 + $0x14] sm:$0xf]
    %v77 = vld [vmem:[#allocation7 + $0x18] sm:$0xf]
    %v78 = vld [vmem:[#allocation7 + $0x1c] sm:$0xf]
    %v79 = vld [vmem:[#allocation7 + $0x20] sm:$0xf]
    %v80 = vld [vmem:[#allocation7 + $0x24] sm:$0xf]
    %v81 = vld [vmem:[#allocation7 + $0x28] sm:$0xf]
    %v82 = vld [vmem:[#allocation7 + $0x2c] sm:$0xf]
    %v83 = vld [vmem:[#allocation7 + $0x30] sm:$0xf]
    %v84 = vld [vmem:[#allocation7 + $0x34] sm:$0xf]
    %v85 = vld [vmem:[#allocation7 + $0x38] sm:$0xf]
    %v86 = vld [vmem:[#allocation7 + $0x3c] sm:$0xf]
    %v103 = vunpack.c.l.b16 %v71
    %v104 = vunpack.c.l.b16 %v72
    %v105 = vunpack.c.l.b16 %v73
    %v106 = vunpack.c.l.b16 %v74
    %v107 = vunpack.c.l.b16 %v75
    %v108 = vunpack.c.l.b16 %v76
    %v109 = vunpack.c.l.b16 %v77
    %v110 = vunpack.c.l.b16 %v78
    %v111 = vunpack.c.l.b16 %v79
    %v112 = vunpack.c.l.b16 %v80
    %v113 = vunpack.c.l.b16 %v81
    %v114 = vunpack.c.l.b16 %v82
    %v115 = vunpack.c.l.b16 %v83
    %v116 = vunpack.c.l.b16 %v84
    %v117 = vunpack.c.l.b16 %v85
    %v118 = vunpack.c.l.b16 %v86
    %v119 = vpack.c.b16 %v104, %v103
    %v120 = vpack.c.b16 %v106, %v105
    %v121 = vpack.c.b16 %v108, %v107
    %v122 = vpack.c.b16 %v110, %v109
    %v123 = vpack.c.b16 %v112, %v111
    %v124 = vpack.c.b16 %v114, %v113
    %v125 = vpack.c.b16 %v116, %v115
    %v126 = vpack.c.b16 %v118, %v117
    %135 = vmatpush.bf16.msra.mxu0 %v126
    %136 = vmatpush.bf16.msra.mxu0 %v125
    %137 = vmatpush.bf16.msra.mxu0 %v124
    %138 = vmatpush.bf16.msra.mxu0 %v123
    %139 = vmatpush.bf16.msra.mxu0 %v122
    %140 = vmatpush.bf16.msra.mxu0 %v121
    %141 = vmatpush.bf16.msra.mxu0 %v120
    %142 = vmatpush.bf16.msra.mxu0 %v119
    %143 = vmatmul.bf16.gmra.mxu0 %v70
    %v144 = vpop.f32.mrf.mxu0
    %v145 = vadd.f32 0.0, %v144
    %v146 = vpop.f32.mrf.mxu0
    %v147 = vadd.f32 0.0, %v146
    %148 = vdwg.mxu0
    %v149 = vpack.c.bf16 %v145, %v145
    %v150 = vpack.c.bf16 %v147, %v147
    %151 = vst [vmem:[#allocation8] sm:$0xf] %v149
    %152 = vst [vmem:[#allocation8 + $0x4] sm:$0xf] %v150
    // Predicated region
    $region26: #{tpu_custom_call.1} parent=1 // pred_check
      _
    $region27: #{tpu_custom_call.1} parent=1 // pred_check_branch
      %154 = sbr.rel (0) target = $region29
    $region28: #{tpu_custom_call.1} parent=1 // pred_region
      %156 = vsyncadd [#allocation4], 0
      %s157 = sshll.u32 [#allocation8], 4
      %s158 = int_to_ptr.vmem [resolvable:$true] %s157
      %s159 = sshll.u32 %s3, 4
      %s160 = int_to_ptr.hbm [resolvable:$true] %s159
      %165 = dma.vmem_to_hbm [thread:$0]  %s158, 128, %s160, [#allocation4], 64, 64, 4
    $region29: #{tpu_custom_call.1} parent=1 // pred_fallthru
      _
    // Predicated region
    $region30: #{tpu_custom_call.1} parent=1 // pred_check
      _
    $region31: #{tpu_custom_call.1} parent=1 // pred_check_branch
      %167 = sbr.rel (0) target = $region33
    $region32: #{tpu_custom_call.1} parent=1 // pred_region
      %169 = dma.done [#allocation4], 128
    $region33: #{tpu_custom_call.1} parent=1 // pred_fallthru
      _
    %170 = vsyncpa [#allocation3], 1
    %171 = vsyncpa [#allocation6], 1
    %172 = vsyncpa [#allocation4], 1

</llo_original>
